<compile_context>
chip_gen: v5e
topology: v5e:2x2
jax: 0.10.0
libtpu: 0.0.40
codegen_flags: <defaults>
</compile_context>

<pallas_src>
import jax
import jax.numpy as jnp
from jax.experimental import pallas as pl
from jax.experimental.pallas import tpu as pltpu

_MIB = 1024 * 1024


# ---------------------------------------------------------------------------
# Generation-aware tiling configuration
# ---------------------------------------------------------------------------
def _vmem_capacity_bytes():
    try:
        info = pltpu.get_tpu_info()
        cap = getattr(info, "vmem_capacity_bytes", None)
        if cap:
            return int(cap)
    except Exception:
        pass
    # Unknown: assume the smallest generation (v7x, 64 MiB per TensorCore)
    # so we never exceed physical VMEM.
    return 64 * _MIB


def _tiling_config():
    cap = _vmem_capacity_bytes()
    if cap <= 64 * _MIB:
        # v7x-class: 64 MiB VMEM -> cap double-buffered working set ~40 MiB.
        return dict(vmem_limit=48 * _MIB, budget=40 * _MIB,
                    tm_pref=1024, tn_pref=1024, tk_pref=2048)
    # v5e / v6e: 128 MiB VMEM -> deeper reduction tiles, larger scoped VMEM.
    return dict(vmem_limit=96 * _MIB, budget=80 * _MIB,
                tm_pref=1024, tn_pref=1024, tk_pref=4096)


def _tile_candidates(dim, align, preferred):
    """Descending list of legal tile sizes for `dim`: aligned divisors capped
    at `preferred` (fallback: smallest aligned divisor; full dim if the dim
    itself is not aligned — a full-extent block is always legal)."""
    if dim % align != 0:
        return [dim]
    divs = [t for t in range(align, dim + 1, align) if dim % t == 0]
    divs.sort(reverse=True)
    capped = [t for t in divs if t <= preferred]
    return capped if capped else [divs[-1]]


def _pick_tiles(M, N, K, cfg, ws_bytes):
    """Largest (tm, tn, tk) — prioritizing tm (weight re-streaming scales with
    M/tm), then tn, then tk — whose double-buffered working set fits budget."""
    tm_c = _tile_candidates(M, 8, cfg["tm_pref"])
    tn_c = _tile_candidates(N, 128, cfg["tn_pref"])
    tk_c = _tile_candidates(K, 128, cfg["tk_pref"])
    for tm in tm_c:
        for tn in tn_c:
            for tk in tk_c:
                if ws_bytes(tm, tn, tk) <= cfg["budget"]:
                    return tm, tn, tk
    # Nothing fits: take the smallest tiles and let the explicit
    # vmem_limit_bytes surface the overflow at compile time.
    return tm_c[-1], tn_c[-1], tk_c[-1]


def _ff13_working_set(tm, tn, tk):
    b = 2  # bf16 bytes
    return (2 * tm * tk * b          # x tile, double-buffered
            + 2 * 2 * tk * tn * b    # w1 + w3 tiles, double-buffered
            + 2 * tm * tn * b        # bf16 output tile, double-buffered
            + 2 * tm * tn * 4)       # two fp32 accumulators (scratch)


def _ff2_working_set(tm, tn, tk):
    b = 2
    return (2 * tm * tk * b + 2 * tk * tn * b + 2 * tm * tn * b
            + tm * tn * 4)


# ---------------------------------------------------------------------------
# Kernel 1: fused FF1/FF3 ->  silu(x @ w1) * (x @ w3)    (fp32 accumulation)
# grid = (M/tm, N/tn, K/tk); reduction axis (K = hidden) last.
# ---------------------------------------------------------------------------
def _ff13_kernel(x_ref, w1_ref, w3_ref, out_ref, acc1_ref, acc3_ref):
    k = pl.program_id(2)

    @pl.when(k == 0)
    def _():
        acc1_ref[...] = jnp.zeros_like(acc1_ref)
        acc3_ref[...] = jnp.zeros_like(acc3_ref)

    x = x_ref[...]
    acc1_ref[...] += jnp.dot(x, w1_ref[...], preferred_element_type=jnp.float32)
    acc3_ref[...] += jnp.dot(x, w3_ref[...], preferred_element_type=jnp.float32)

    @pl.when(k == pl.num_programs(2) - 1)
    def _():
        a = acc1_ref[...]
        silu = a * jax.nn.sigmoid(a)          # tt_lib.tensor.silu, fp32
        out_ref[...] = (silu * acc3_ref[...]).astype(out_ref.dtype)


def ff13_fused(x, w1, w3, *, tile_prefs=None):
    """x: [S, H] bf16 (replicated activation); w1, w3: [H, N] bf16, already
    trimmed to the FFN compute extent.  Returns [S, N] bf16."""
    S, H = x.shape
    Hw, N = w1.shape
    assert Hw == H and w3.shape == (H, N)

    cfg = _tiling_config()
    if tile_prefs is not None:
        cfg = dict(cfg, tm_pref=tile_prefs[0], tn_pref=tile_prefs[1],
                   tk_pref=tile_prefs[2])
    tm, tn, tk = _pick_tiles(S, N, H, cfg, _ff13_working_set)
    grid = (S // tm, N // tn, H // tk)

    return pl.pallas_call(
        _ff13_kernel,
        out_shape=jax.ShapeDtypeStruct((S, N), jnp.bfloat16),
        grid_spec=pltpu.PrefetchScalarGridSpec(
            num_scalar_prefetch=0,
            grid=grid,
            in_specs=[
                pl.BlockSpec((tm, tk), lambda i, j, k: (i, k)),
                pl.BlockSpec((tk, tn), lambda i, j, k: (k, j)),
                pl.BlockSpec((tk, tn), lambda i, j, k: (k, j)),
            ],
            out_specs=pl.BlockSpec((tm, tn), lambda i, j, k: (i, j)),
            scratch_shapes=[pltpu.VMEM((tm, tn), jnp.float32),
                            pltpu.VMEM((tm, tn), jnp.float32)],
        ),
        compiler_params=pltpu.CompilerParams(
            dimension_semantics=("parallel", "parallel", "arbitrary"),
            vmem_limit_bytes=cfg["vmem_limit"],
        ),
    )(x, w1, w3)


# ---------------------------------------------------------------------------
# Kernel 2: FF2 tiled matmul (bf16 streams, fp32 accumulation, bf16 output)
# ---------------------------------------------------------------------------
def _ff2_kernel(x_ref, w_ref, out_ref, acc_ref):
    k = pl.program_id(2)

    @pl.when(k == 0)
    def _():
        acc_ref[...] = jnp.zeros_like(acc_ref)

    acc_ref[...] += jnp.dot(x_ref[...], w_ref[...],
                            preferred_element_type=jnp.float32)

    @pl.when(k == pl.num_programs(2) - 1)
    def _():
        out_ref[...] = acc_ref[...].astype(out_ref.dtype)


def ff2_matmul(x, w, *, tile_prefs=None):
    """x: [S, Kc] bf16 (trimmed intermediate), w: [Kc, H] bf16 -> [S, H] bf16."""
    M, K = x.shape
    K2, N = w.shape
    assert K2 == K

    cfg = _tiling_config()
    if tile_prefs is not None:
        cfg = dict(cfg, tm_pref=tile_prefs[0], tn_pref=tile_prefs[1],
                   tk_pref=tile_prefs[2])
    tm, tn, tk = _pick_tiles(M, N, K, cfg, _ff2_working_set)
    grid = (M // tm, N // tn, K // tk)

    return pl.pallas_call(
        _ff2_kernel,
        out_shape=jax.ShapeDtypeStruct((M, N), jnp.bfloat16),
        grid_spec=pltpu.PrefetchScalarGridSpec(
            num_scalar_prefetch=0,
            grid=grid,
            in_specs=[
                pl.BlockSpec((tm, tk), lambda i, j, k: (i, k)),
                pl.BlockSpec((tk, tn), lambda i, j, k: (k, j)),
            ],
            out_specs=pl.BlockSpec((tm, tn), lambda i, j, k: (i, j)),
            scratch_shapes=[pltpu.VMEM((tm, tn), jnp.float32)],
        ),
        compiler_params=pltpu.CompilerParams(
            dimension_semantics=("parallel", "parallel", "arbitrary"),
            vmem_limit_bytes=cfg["vmem_limit"],
        ),
    )(x, w)


# ---------------------------------------------------------------------------
# TtLlamaMLP equivalent
# ---------------------------------------------------------------------------
class LlamaMLPPallas:
    """Mirrors TtLlamaMLP: transposed + zero-padded weights, silu(x@W1)*(x@W3)
    with fp32 accumulation, then @W2.  The per-device column chunking and the
    all-gather are modeled by the column layout of the single-chip matmuls
    (device d's FF2 output is out[:, d*H/D:(d+1)*H/D])."""

    def __init__(self, num_devices, hidden_size, ffn_size, padded_ffn_size,
                 w1, w3, w2, *, tile_prefs=None):
        # w1, w3: [H4, H]; w2: [H, H4]   (torch state_dict [out, in] layout)
        assert padded_ffn_size >= ffn_size
        assert hidden_size % num_devices == 0
        assert padded_ffn_size % num_devices == 0
        self.num_devices = num_devices
        self.hidden_size = hidden_size
        self.ffn_size = ffn_size
        self.padded_ffn_size = padded_ffn_size
        self.tile_prefs = tile_prefs

        H, H4, PH4 = hidden_size, ffn_size, padded_ffn_size
        # The TT module zero-pads the FFN dim to PADDED_H4.  Because the
        # padding is exactly zero, the padded columns of W1/W3 and rows of W2
        # contribute nothing; we keep only the compute extent (ffn rounded up
        # to the 128-lane boundary) — skipping ~12.5% of Llama-70B FFN FLOPs
        # and weight HBM bytes.  NOTE: this trim is only valid while the
        # padding stays exactly zero (no quantization zero-points etc.).
        ph4_c = min(PH4, ((H4 + 127) // 128) * 128)
        self.ffn_compute = ph4_c

        w1_t = jnp.transpose(jnp.asarray(w1, jnp.float32))   # [H, H4]
        w3_t = jnp.transpose(jnp.asarray(w3, jnp.float32))   # [H, H4]
        w2_t = jnp.transpose(jnp.asarray(w2, jnp.float32))   # [H4, H]

        # Weight-streaming-bound workload -> bf16 weight streams.
        # TODO(synk): int8 weights (per-channel scales) for v5e/v6e decode and
        #             fp8 e4m3 on v7x (its MXU has no integer path).
        self.w1_c = (jnp.zeros((H, ph4_c), jnp.float32)
                     .at[:, :H4].set(w1_t).astype(jnp.bfloat16))
        self.w3_c = (jnp.zeros((H, ph4_c), jnp.float32)
                     .at[:, :H4].set(w3_t).astype(jnp.bfloat16))
        self.w2_c = (jnp.zeros((ph4_c, H), jnp.float32)
                     .at[:H4, :].set(w2_t).astype(jnp.bfloat16))

    def __call__(self, xs):
        # The T3000 pipeline feeds the same activation to every device, so we
        # use a single copy (no D× stack / D× re-fetch of x).
        # TODO(synk): genuinely distinct per-device activations would need a
        #             device grid axis on FF13 again.
        x = xs[0] if isinstance(xs, (list, tuple)) else xs
        x = x.astype(jnp.bfloat16)

        # Fused FF1/FF3 + silu*mul over the trimmed FFN extent.  The result is
        # exactly the (all-gathered) intermediate the module builds, minus the
        # all-zero padded columns FF2 never needs.
        inter = ff13_fused(x, self.w1_c, self.w3_c, tile_prefs=self.tile_prefs)

        # FF2 over the full (trimmed) W2.  Device d's output chunk is
        # out[:, d*H/D:(d+1)*H/D]; returned un-split to avoid D extra copies.
        out = ff2_matmul(inter, self.w2_c, tile_prefs=self.tile_prefs)
        return out


if __name__ == "__main__":
    # Small, proportional stand-ins for H=8192, H4=28672, PADDED_H4=32768.
    NUM_DEVICES = 2
    SEQ = 64
    H = 256          # hidden_size
    H4 = 320         # true ffn size (not 128-aligned -> exercises the pad)
    PADDED_H4 = 512  # padded ffn size

    key = jax.random.PRNGKey(0)
    k1, k2, k3, kx = jax.random.split(key, 4)
    # state_dict layout: [out, in]
    w1 = jax.random.normal(k1, (H4, H), jnp.float32) * 0.02
    w3 = jax.random.normal(k2, (H4, H), jnp.float32) * 0.02
    w2 = jax.random.normal(k3, (H, H4), jnp.float32) * 0.02
    x = jax.random.normal(kx, (SEQ, H), jnp.float32)

    # Tiny tile prefs so the test exercises multi-step grids / accumulators.
    mlp = LlamaMLPPallas(NUM_DEVICES, H, H4, PADDED_H4, w1, w3, w2,
                         tile_prefs=(32, 128, 128))
    xs = [x for _ in range(NUM_DEVICES)]   # replicated input, as in the model

    out = jax.block_until_ready(mlp(xs))
    assert out.shape == (SEQ, H) and out.dtype == jnp.bfloat16

    # Reference with matching numerics: bf16 streams, fp32 accumulation,
    # bf16 intermediate, bf16 output (intentional deviation from an fp32
    # reference — standard for Llama inference).
    xb = x.astype(jnp.bfloat16)
    a = jnp.dot(xb, w1.T.astype(jnp.bfloat16),
                preferred_element_type=jnp.float32)
    b = jnp.dot(xb, w3.T.astype(jnp.bfloat16),
                preferred_element_type=jnp.float32)
    inter_ref = (a * jax.nn.sigmoid(a) * b).astype(jnp.bfloat16)
    out_ref = jnp.dot(inter_ref, w2.T.astype(jnp.bfloat16),
                      preferred_element_type=jnp.float32).astype(jnp.bfloat16)

    assert jnp.allclose(out.astype(jnp.float32), out_ref.astype(jnp.float32),
                        atol=5e-3, rtol=3e-2)

    # Per-device chunks (column slices) reproduce the module's output list.
    chunks = [out[:, d * (H // NUM_DEVICES):(d + 1) * (H // NUM_DEVICES)]
              for d in range(NUM_DEVICES)]
    assert all(c.shape == (SEQ, H // NUM_DEVICES) for c in chunks)

    print("KERNEL_OK")
</pallas_src>

<mosaic_0001>
module attributes {stable_mosaic.version = 11 : i64} {
  func.func @_ff13_kernel(%arg0: i32, %arg1: i32, %arg2: i32, %arg3: memref<32x128xbf16, #tpu.memory_space<vmem>>, %arg4: memref<128x128xbf16, #tpu.memory_space<vmem>>, %arg5: memref<128x128xbf16, #tpu.memory_space<vmem>>, %arg6: memref<32x128xbf16, #tpu.memory_space<vmem>>, %arg7: memref<32x128xf32, #tpu.memory_space<vmem>>, %arg8: memref<32x128xf32, #tpu.memory_space<vmem>>) attributes {dimension_semantics = [#tpu.dimension_semantics<parallel>, #tpu.dimension_semantics<parallel>, #tpu.dimension_semantics<arbitrary>], iteration_bounds = array<i64: 2, 3, 2>, scalar_prefetch = 0 : i64, scratch_operands = 2 : i64, tpu.core_type = #tpu.core_type<tc>, window_params = [{transform_indices = @transform_0, window_bounds = array<i64: 32, 128>}, {transform_indices = @transform_1, window_bounds = array<i64: 128, 128>}, {transform_indices = @transform_2, window_bounds = array<i64: 128, 128>}, {transform_indices = @transform_3, window_bounds = array<i64: 32, 128>}]} {
    %c0_i32 = arith.constant 0 : i32
    %0 = arith.cmpi eq, %arg2, %c0_i32 : i32
    %1 = arith.extui %0 : i1 to i32
    %c0_i32_0 = arith.constant 0 : i32
    %2 = arith.cmpi ne, %1, %c0_i32_0 : i32
    scf.if %2 {
      %cst_16 = arith.constant 0.000000e+00 : f32
      %17 = vector.broadcast %cst_16 : f32 to vector<32x128xf32>
      %c0_17 = arith.constant 0 : index
      %c0_18 = arith.constant 0 : index
      %18 = vector.load %arg7[%c0_17, %c0_18] : memref<32x128xf32, #tpu.memory_space<vmem>>, vector<32x128xf32>
      tpu.vector_store %arg7[%c0_17, %c0_18], %17 {strides = array<i32>} : memref<32x128xf32, #tpu.memory_space<vmem>>, vector<32x128xf32>,
      %cst_19 = arith.constant 0.000000e+00 : f32
      %19 = vector.broadcast %cst_19 : f32 to vector<32x128xf32>
      %c0_20 = arith.constant 0 : index
      %c0_21 = arith.constant 0 : index
      %20 = vector.load %arg8[%c0_20, %c0_21] : memref<32x128xf32, #tpu.memory_space<vmem>>, vector<32x128xf32>
      tpu.vector_store %arg8[%c0_20, %c0_21], %19 {strides = array<i32>} : memref<32x128xf32, #tpu.memory_space<vmem>>, vector<32x128xf32>,
    } else {
    }
    %c0 = arith.constant 0 : index
    %c0_1 = arith.constant 0 : index
    %3 = vector.load %arg3[%c0, %c0_1] : memref<32x128xbf16, #tpu.memory_space<vmem>>, vector<32x128xbf16>
    %c0_2 = arith.constant 0 : index
    %c0_3 = arith.constant 0 : index
    %4 = vector.load %arg7[%c0_2, %c0_3] : memref<32x128xf32, #tpu.memory_space<vmem>>, vector<32x128xf32>
    %c0_4 = arith.constant 0 : index
    %c0_5 = arith.constant 0 : index
    %5 = vector.load %arg4[%c0_4, %c0_5] : memref<128x128xbf16, #tpu.memory_space<vmem>>, vector<128x128xbf16>
    %cst = arith.constant dense<0.000000e+00> : vector<32x128xf32>
    %6 = tpu.matmul %3, %5, %cst {dimension_numbers = #tpu.dot_dimension_numbers<[1], [0], [0], [1], [0, 0, 1, 1], [], []>} : vector<32x128xbf16>, vector<128x128xbf16>, vector<32x128xf32> -> vector<32x128xf32>
    %7 = arith.addf %4, %6 : vector<32x128xf32>
    %c0_6 = arith.constant 0 : index
    %c0_7 = arith.constant 0 : index
    %8 = vector.load %arg7[%c0_6, %c0_7] : memref<32x128xf32, #tpu.memory_space<vmem>>, vector<32x128xf32>
    tpu.vector_store %arg7[%c0_6, %c0_7], %7 {strides = array<i32>} : memref<32x128xf32, #tpu.memory_space<vmem>>, vector<32x128xf32>,
    %c0_8 = arith.constant 0 : index
    %c0_9 = arith.constant 0 : index
    %9 = vector.load %arg8[%c0_8, %c0_9] : memref<32x128xf32, #tpu.memory_space<vmem>>, vector<32x128xf32>
    %c0_10 = arith.constant 0 : index
    %c0_11 = arith.constant 0 : index
    %10 = vector.load %arg5[%c0_10, %c0_11] : memref<128x128xbf16, #tpu.memory_space<vmem>>, vector<128x128xbf16>
    %cst_12 = arith.constant dense<0.000000e+00> : vector<32x128xf32>
    %11 = tpu.matmul %3, %10, %cst_12 {dimension_numbers = #tpu.dot_dimension_numbers<[1], [0], [0], [1], [0, 0, 1, 1], [], []>} : vector<32x128xbf16>, vector<128x128xbf16>, vector<32x128xf32> -> vector<32x128xf32>
    %12 = arith.addf %9, %11 : vector<32x128xf32>
    %c0_13 = arith.constant 0 : index
    %c0_14 = arith.constant 0 : index
    %13 = vector.load %arg8[%c0_13, %c0_14] : memref<32x128xf32, #tpu.memory_space<vmem>>, vector<32x128xf32>
    tpu.vector_store %arg8[%c0_13, %c0_14], %12 {strides = array<i32>} : memref<32x128xf32, #tpu.memory_space<vmem>>, vector<32x128xf32>,
    %c1_i32 = arith.constant 1 : i32
    %14 = arith.cmpi eq, %arg2, %c1_i32 : i32
    %15 = arith.extui %14 : i1 to i32
    %c0_i32_15 = arith.constant 0 : i32
    %16 = arith.cmpi ne, %15, %c0_i32_15 : i32
    scf.if %16 {
      %c0_16 = arith.constant 0 : index
      %c0_17 = arith.constant 0 : index
      %17 = vector.load %arg7[%c0_16, %c0_17] : memref<32x128xf32, #tpu.memory_space<vmem>>, vector<32x128xf32>
      %18 = arith.negf %17 : vector<32x128xf32>
      %19 = math.exp %18 : vector<32x128xf32>
      %cst_18 = arith.constant 1.000000e+00 : f32
      %20 = vector.broadcast %cst_18 : f32 to vector<32x128xf32>
      %21 = arith.addf %20, %19 : vector<32x128xf32>
      %22 = arith.divf %20, %21 : vector<32x128xf32>
      %23 = arith.mulf %17, %22 : vector<32x128xf32>
      %c0_19 = arith.constant 0 : index
      %c0_20 = arith.constant 0 : index
      %24 = vector.load %arg8[%c0_19, %c0_20] : memref<32x128xf32, #tpu.memory_space<vmem>>, vector<32x128xf32>
      %25 = arith.mulf %23, %24 : vector<32x128xf32>
      %26 = arith.truncf %25 : vector<32x128xf32> to vector<32x128xbf16>
      %c0_21 = arith.constant 0 : index
      %c0_22 = arith.constant 0 : index
      %27 = vector.load %arg6[%c0_21, %c0_22] : memref<32x128xbf16, #tpu.memory_space<vmem>>, vector<32x128xbf16>
      tpu.vector_store %arg6[%c0_21, %c0_22], %26 {strides = array<i32>} : memref<32x128xbf16, #tpu.memory_space<vmem>>, vector<32x128xbf16>,
    } else {
    }
    return
  }
  func.func @transform_0(%arg0: i32, %arg1: i32, %arg2: i32) -> (i32, i32) {
    %c0_i32 = arith.constant 0 : i32
    return %arg0, %arg2 : i32, i32
  }
  func.func @transform_1(%arg0: i32, %arg1: i32, %arg2: i32) -> (i32, i32) {
    %c0_i32 = arith.constant 0 : i32
    return %arg2, %arg1 : i32, i32
  }
  func.func @transform_2(%arg0: i32, %arg1: i32, %arg2: i32) -> (i32, i32) {
    %c0_i32 = arith.constant 0 : i32
    return %arg2, %arg1 : i32, i32
  }
  func.func @transform_3(%arg0: i32, %arg1: i32, %arg2: i32) -> (i32, i32) {
    %c0_i32 = arith.constant 0 : i32
    return %arg0, %arg1 : i32, i32
  }
}

</mosaic_0001>

<llo_original>
// kernel: tpu_custom_call.1
$region0: #{tpu_custom_call.1}
  #allocation0 [shape = 'u32[]', space=smem, size = 0x4, offset = 0x4, fixed_abs, tag = 'smem constant byte address 0x4 - core index']
  #allocation1 [shape = 'u32[72,128]{1,0:T(1,128)}', space=vmem, size = 0x9000, scoped, tag = 'internal scratch']
  #allocation2 [shape = 'f32[32,128]{1,0:T(8,128)}', space=vmem, size = 0x4000, scoped, tag = 'scratch operand']
  #allocation3 [shape = 'f32[32,128]{1,0:T(8,128)}', space=vmem, size = 0x4000, scoped, tag = 'scratch operand']
  %s0 = inlined_call_operand.hbm [shape: bf16[64,256], index: 0, kind: input, shape index: {}]
  %s1 = inlined_call_operand.hbm [shape: bf16[256,384], index: 1, kind: input, shape index: {}]
  %s2 = inlined_call_operand.hbm [shape: bf16[256,384], index: 2, kind: input, shape index: {}]
  %s3 = inlined_call_operand.hbm [shape: bf16[64,384], index: 3, kind: output, shape index: {}]
  %s4 = sld [smem:[#allocation0]]
  $region65: #{tpu_custom_call.1} parent=0
    _
  %s6 = ssub.s32 1, %s4
  %s7 = scalar_select 0, %s6, %s4
  $region1: #{tpu_custom_call.1} parent=0
    #allocation4 [shape = 'u8[16384]{0}', space=vmem, size = 0x4000, scoped, tag = 'input window, operand 0']
    #allocation5 [shape = 's32[2]{0}', space=sflag, size = 0x8, scoped, tag = 'scoped memory for tpu_custom_call.1']
    #allocation6 [shape = 's32[2]{0}', space=sflag, size = 0x8, scoped, tag = 'scoped memory for tpu_custom_call.1']
    #allocation7 [shape = 'u8[65536]{0}', space=vmem, size = 0x10000, scoped, tag = 'input window, operand 1']
    #allocation8 [shape = 's32[2]{0}', space=sflag, size = 0x8, scoped, tag = 'scoped memory for tpu_custom_call.1']
    #allocation9 [shape = 'u8[65536]{0}', space=vmem, size = 0x10000, scoped, tag = 'input window, operand 2']
    #allocation10 [shape = 'u8[16384]{0}', space=vmem, size = 0x4000, scoped, tag = 'output window, operand 0']
    %8 = vsyncpa [#allocation5], 0
    %s9 = scalar_lea.sflag [#allocation5], 1
    %10 = vsyncpa %s9, 0
    %11 = vsyncpa [#allocation8], 0
    %s12 = scalar_lea.sflag [#allocation8], 1
    %13 = vsyncpa %s12, 0
    %14 = vsyncpa [#allocation6], 0
    %s15 = scalar_lea.sflag [#allocation6], 1
    %16 = vsyncpa %s15, 0
    loop: start=0, step=1, limit=14
    $region2: #{tpu_custom_call.1} parent=1 // loop_pre_header
      _
    $region3: #{tpu_custom_call.1} parent=1 // loop_header
      %s18 = sphi 0, %s22
      %p19 = scmp.ge.s32.totalorder %s18, 14
      %s25 = sphi 0, %s44
      %s26 = sphi 0, %s40
      %s27 = sphi 0, %s36
      %s28 = sphi 0, %s25
      %s29 = sphi 0, %s26
      %s30 = sphi 0, %s27
      %s31 = sphi 0, %s28
      %s32 = sphi 0, %s29
      %s33 = sphi 0, %s30
      %s49 = sphi 0, %s51
      %s52 = sphi 0, %s49
      %s53 = sphi 0, %s52
      %s69 = sphi 0, %s53
      %s77 = sphi 0, %s79
      %s80 = sphi 0, %s77
      %s81 = sphi 0, %s80
      %s97 = sphi 0, %s81
      %s105 = sphi 0, %s107
      %s108 = sphi 0, %s105
      %s109 = sphi 0, %s108
      %s125 = sphi 0, %s109
      %s133 = sphi 0, %s135
      %s136 = sphi 0, %s133
      %s137 = sphi 0, %s136
      %s153 = sphi 0, %s137
    $region4: #{tpu_custom_call.1} parent=1 // loop_header_branch
      %21 = sbr.rel (%p19) target = $region8
    $region5: #{tpu_custom_call.1} parent=1 // loop_body
      %s23 = ssub.s32 %s18, 1
      %s24 = ssub.s32 %s18, 2
      %s34 = sadd.s32 1, %s27
      %p35 = scmp.ge.s32.totalorder %s34, 2
      %s36 = scalar_select %p35, 0, %s34
      %s37 = sadd.s32 1, %s26
      %s38 = scalar_select %p35, %s37, %s26
      %p39 = scmp.ge.s32.totalorder %s38, 3
      %s40 = scalar_select %p39, 0, %s38
      %s41 = sadd.s32 1, %s25
      %s42 = scalar_select %p39, %s41, %s25
      %p43 = scmp.ge.s32.totalorder %s42, 2
      %s44 = scalar_select %p43, 0, %s42
      %s45 = ssub.s32 %s25, %s44
      %s46 = ssub.s32 %s27, %s36
      %s47 = sor.u32 %s45, %s46
      %p48 = scmp.eq.s32.totalorder %s47, 0
      %s50 = sadd.s32 %s49, 1
      %s51 = scalar_select %p48, %s49, %s50
      %p54 = pneg %p48
      %p55 = scmp.eq.s32.totalorder %s18, 11
      %p56 = por %p54, %p55
      %p57 = scmp.ne.s32.totalorder %s49, %s52
      %p58 = scmp.eq.s32.totalorder %s18, 0
      %p59 = por %p57, %p58
      %p60 = scmp.ne.s32.totalorder %s49, %s52
      %p61 = scmp.eq.s32.totalorder %s23, 11
      %p62 = por %p60, %p61
      %p63 = scmp.ne.s32.totalorder %s52, %s53
      %p64 = scmp.eq.s32.totalorder %s23, 0
      %p65 = por %p63, %p64
      %p66 = scmp.ne.s32.totalorder %s52, %s53
      %p67 = scmp.eq.s32.totalorder %s24, 11
      %p68 = por %p66, %p67
      %p70 = scmp.ne.s32.totalorder %s53, %s69
      %p71 = scmp.eq.s32.totalorder %s24, 0
      %p72 = por %p70, %p71
      %s73 = ssub.s32 %s27, %s36
      %s74 = ssub.s32 %s26, %s40
      %s75 = sor.u32 %s73, %s74
      %p76 = scmp.eq.s32.totalorder %s75, 0
      %s78 = sadd.s32 %s77, 1
      %s79 = scalar_select %p76, %s77, %s78
      %p82 = pneg %p76
      %p83 = scmp.eq.s32.totalorder %s18, 11
      %p84 = por %p82, %p83
      %p85 = scmp.ne.s32.totalorder %s77, %s80
      %p86 = scmp.eq.s32.totalorder %s18, 0
      %p87 = por %p85, %p86
      %p88 = scmp.ne.s32.totalorder %s77, %s80
      %p89 = scmp.eq.s32.totalorder %s23, 11
      %p90 = por %p88, %p89
      %p91 = scmp.ne.s32.totalorder %s80, %s81
      %p92 = scmp.eq.s32.totalorder %s23, 0
      %p93 = por %p91, %p92
      %p94 = scmp.ne.s32.totalorder %s80, %s81
      %p95 = scmp.eq.s32.totalorder %s24, 11
      %p96 = por %p94, %p95
      %p98 = scmp.ne.s32.totalorder %s81, %s97
      %p99 = scmp.eq.s32.totalorder %s24, 0
      %p100 = por %p98, %p99
      %s101 = ssub.s32 %s27, %s36
      %s102 = ssub.s32 %s26, %s40
      %s103 = sor.u32 %s101, %s102
      %p104 = scmp.eq.s32.totalorder %s103, 0
      %s106 = sadd.s32 %s105, 1
      %s107 = scalar_select %p104, %s105, %s106
      %p110 = pneg %p104
      %p111 = scmp.eq.s32.totalorder %s18, 11
      %p112 = por %p110, %p111
      %p113 = scmp.ne.s32.totalorder %s105, %s108
      %p114 = scmp.eq.s32.totalorder %s18, 0
      %p115 = por %p113, %p114
      %p116 = scmp.ne.s32.totalorder %s105, %s108
      %p117 = scmp.eq.s32.totalorder %s23, 11
      %p118 = por %p116, %p117
      %p119 = scmp.ne.s32.totalorder %s108, %s109
      %p120 = scmp.eq.s32.totalorder %s23, 0
      %p121 = por %p119, %p120
      %p122 = scmp.ne.s32.totalorder %s108, %s109
      %p123 = scmp.eq.s32.totalorder %s24, 11
      %p124 = por %p122, %p123
      %p126 = scmp.ne.s32.totalorder %s109, %s125
      %p127 = scmp.eq.s32.totalorder %s24, 0
      %p128 = por %p126, %p127
      %s129 = ssub.s32 %s25, %s44
      %s130 = ssub.s32 %s26, %s40
      %s131 = sor.u32 %s129, %s130
      %p132 = scmp.eq.s32.totalorder %s131, 0
      %s134 = sadd.s32 %s133, 1
      %s135 = scalar_select %p132, %s133, %s134
      %p138 = pneg %p132
      %p139 = scmp.eq.s32.totalorder %s18, 11
      %p140 = por %p138, %p139
      %p141 = scmp.ne.s32.totalorder %s133, %s136
      %p142 = scmp.eq.s32.totalorder %s18, 0
      %p143 = por %p141, %p142
      %p144 = scmp.ne.s32.totalorder %s133, %s136
      %p145 = scmp.eq.s32.totalorder %s23, 11
      %p146 = por %p144, %p145
      %p147 = scmp.ne.s32.totalorder %s136, %s137
      %p148 = scmp.eq.s32.totalorder %s23, 0
      %p149 = por %p147, %p148
      %p150 = scmp.ne.s32.totalorder %s136, %s137
      %p151 = scmp.eq.s32.totalorder %s24, 11
      %p152 = por %p150, %p151
      %p154 = scmp.ne.s32.totalorder %s137, %s153
      %p155 = scmp.eq.s32.totalorder %s24, 0
      %p156 = por %p154, %p155
      %p157 = scmp.le.s32.totalorder 1, %s18
      %p158 = scmp.lt.s32.totalorder %s18, 13
      %p159 = pnand %p157, %p158
      %p160 = pneg %p159
      // Predicated region
      $region9: #{tpu_custom_call.1} parent=5 // pred_check
        _
      $region10: #{tpu_custom_call.1} parent=5 // pred_check_branch
        %162 = sbr.rel (%p159) target = $region12
      $region11: #{tpu_custom_call.1} parent=5 // pred_region
        %s163 = ssub.s32 %s18, 1
      $region12: #{tpu_custom_call.1} parent=5 // pred_fallthru
        _
      %p164 = scmp.lt.s32.totalorder %s18, 12
      // Predicated region
      $region13: #{tpu_custom_call.1} parent=5 // pred_check
        %p165 = pneg %p164
      $region14: #{tpu_custom_call.1} parent=5 // pred_check_branch
        %167 = sbr.rel (%p165) target = $region16
      $region15: #{tpu_custom_call.1} parent=5 // pred_region
        // Predicated region
        $region17: #{tpu_custom_call.1} parent=15 // pred_check
          %p168 = pneg %p59
        $region18: #{tpu_custom_call.1} parent=15 // pred_check_branch
          %170 = sbr.rel (%p168) target = $region20
        $region19: #{tpu_custom_call.1} parent=15 // pred_region
          %s171 = sand.u32 %s49, 1
          %s172 = scalar_lea.sflag [#allocation5], %s171
          %s173 = sand.u32 %s49, 1
          %s174 = smul.addr %s173, 16
          %s175 = scalar_lea.vmem [#allocation4], %s174
          %s176 = smul.u32 4, %s25
          %178 = vsyncadd %s172, 0
          %s179 = smul.addr %s176, 2
          %s180 = sadd.s32 %s27, %s179
          %s181 = smul.addr %s180, 4
          %s182 = scalar_lea.hbm %s0, %s181
          %s183 = sshll.u32 %s182, 4
          %s184 = int_to_ptr.hbm [resolvable:$true] %s183
          %s185 = sshll.u32 %s175, 4
          %s186 = int_to_ptr.vmem [resolvable:$true] %s185
          %191 = dma.hbm_to_vmem [thread:$0]  %s184, 256, %s186, %s172, 128, 64, 4
        $region20: #{tpu_custom_call.1} parent=15 // pred_fallthru
          _
        // Predicated region
        $region21: #{tpu_custom_call.1} parent=15 // pred_check
          %p192 = pneg %p87
        $region22: #{tpu_custom_call.1} parent=15 // pred_check_branch
          %194 = sbr.rel (%p192) target = $region24
        $region23: #{tpu_custom_call.1} parent=15 // pred_region
          %s195 = sand.u32 %s18, 1
          %s196 = scalar_lea.sflag [#allocation8], %s195
          %s197 = sand.u32 %s77, 1
          %s198 = smul.addr %s197, 64
          %s199 = scalar_lea.vmem [#allocation7], %s198
          %s200 = smul.u32 16, %s27
          %202 = vsyncadd %s196, 0
          %s203 = smul.addr %s200, 3
          %s204 = sadd.s32 %s26, %s203
          %s205 = smul.addr %s204, 4
          %s206 = scalar_lea.hbm %s1, %s205
          %s207 = sshll.u32 %s206, 4
          %s208 = int_to_ptr.hbm [resolvable:$true] %s207
          %s209 = sshll.u32 %s199, 4
          %s210 = int_to_ptr.vmem [resolvable:$true] %s209
          %215 = dma.hbm_to_vmem [thread:$0]  %s208, 1024, %s210, %s196, 192, 64, 4
        $region24: #{tpu_custom_call.1} parent=15 // pred_fallthru
          _
        // Predicated region
        $region25: #{tpu_custom_call.1} parent=15 // pred_check
          %p216 = pneg %p115
        $region26: #{tpu_custom_call.1} parent=15 // pred_check_branch
          %218 = sbr.rel (%p216) target = $region28
        $region27: #{tpu_custom_call.1} parent=15 // pred_region
          %s219 = sand.u32 %s18, 1
          %s220 = scalar_lea.sflag [#allocation8], %s219
          %s221 = sand.u32 %s105, 1
          %s222 = smul.addr %s221, 64
          %s223 = scalar_lea.vmem [#allocation9], %s222
          %s224 = smul.u32 16, %s27
          %226 = vsyncadd %s220, 0
          %s227 = smul.addr %s224, 3
          %s228 = sadd.s32 %s26, %s227
          %s229 = smul.addr %s228, 4
          %s230 = scalar_lea.hbm %s2, %s229
          %s231 = sshll.u32 %s230, 4
          %s232 = int_to_ptr.hbm [resolvable:$true] %s231
          %s233 = sshll.u32 %s223, 4
          %s234 = int_to_ptr.vmem [resolvable:$true] %s233
          %239 = dma.hbm_to_vmem [thread:$0]  %s232, 1024, %s234, %s220, 192, 64, 4
        $region28: #{tpu_custom_call.1} parent=15 // pred_fallthru
          _
      $region16: #{tpu_custom_call.1} parent=5 // pred_fallthru
        _
      %p240 = scmp.le.s32.totalorder 1, %s18
      %p241 = scmp.lt.s32.totalorder %s18, 13
      %p242 = pnand %p240, %p241
      %p243 = pneg %p242
      // Predicated region
      $region29: #{tpu_custom_call.1} parent=5 // pred_check
        _
      $region30: #{tpu_custom_call.1} parent=5 // pred_check_branch
        %245 = sbr.rel (%p242) target = $region32
      $region31: #{tpu_custom_call.1} parent=5 // pred_region
        %s246 = ssub.s32 %s18, 1
        %s247 = sand.u32 %s52, 1
        %s248 = scalar_lea.sflag [#allocation5], %s247
        %s249 = sand.u32 %s52, 1
        %s250 = smul.addr %s249, 16
        %s251 = scalar_lea.vmem [#allocation4], %s250
        // Predicated region
        $region33: #{tpu_custom_call.1} parent=31 // pred_check
          %p252 = pneg %p65
        $region34: #{tpu_custom_call.1} parent=31 // pred_check_branch
          %254 = sbr.rel (%p252) target = $region36
        $region35: #{tpu_custom_call.1} parent=31 // pred_region
          %256 = dma.done %s248, 256
        $region36: #{tpu_custom_call.1} parent=31 // pred_fallthru
          _
        %s257 = sand.u32 %s23, 1
        %s258 = scalar_lea.sflag [#allocation8], %s257
        %s259 = sand.u32 %s80, 1
        %s260 = smul.addr %s259, 64
        %s261 = scalar_lea.vmem [#allocation7], %s260
        // Predicated region
        $region37: #{tpu_custom_call.1} parent=31 // pred_check
          %p262 = pneg %p93
        $region38: #{tpu_custom_call.1} parent=31 // pred_check_branch
          %264 = sbr.rel (%p262) target = $region40
        $region39: #{tpu_custom_call.1} parent=31 // pred_region
          %266 = dma.done %s258, 1024
        $region40: #{tpu_custom_call.1} parent=31 // pred_fallthru
          _
        %s267 = sand.u32 %s23, 1
        %s268 = scalar_lea.sflag [#allocation8], %s267
        %s269 = sand.u32 %s108, 1
        %s270 = smul.addr %s269, 64
        %s271 = scalar_lea.vmem [#allocation9], %s270
        // Predicated region
        $region41: #{tpu_custom_call.1} parent=31 // pred_check
          %p272 = pneg %p121
        $region42: #{tpu_custom_call.1} parent=31 // pred_check_branch
          %274 = sbr.rel (%p272) target = $region44
        $region43: #{tpu_custom_call.1} parent=31 // pred_region
          %276 = dma.done %s268, 1024
        $region44: #{tpu_custom_call.1} parent=31 // pred_fallthru
          _
        %s277 = sand.u32 %s52, 1
        %s278 = scalar_lea.sflag [#allocation5], %s277
        %s279 = sand.u32 %s52, 1
        %s280 = smul.addr %s279, 16
        %s281 = scalar_lea.vmem [#allocation4], %s280
        %p282 = pneg %p65
        %p283 = pneg %p62
        %s284 = sand.u32 %s23, 1
        %s285 = scalar_lea.sflag [#allocation8], %s284
        %s286 = sand.u32 %s80, 1
        %s287 = smul.addr %s286, 64
        %s288 = scalar_lea.vmem [#allocation7], %s287
        %p289 = pneg %p93
        %p290 = pneg %p90
        %s291 = sand.u32 %s23, 1
        %s292 = scalar_lea.sflag [#allocation8], %s291
        %s293 = sand.u32 %s108, 1
        %s294 = smul.addr %s293, 64
        %s295 = scalar_lea.vmem [#allocation9], %s294
        %p296 = pneg %p121
        %p297 = pneg %p118
        %p298 = pneg %p149
        %p299 = pneg %p146
        %s300 = sand.u32 %s136, 1
        %s301 = scalar_lea.sflag [#allocation6], %s300
        %s302 = sand.u32 %s136, 1
        %s303 = smul.addr %s302, 16
        %s304 = scalar_lea.vmem [#allocation10], %s303
        %s305 = smul.u32 4, %s28
        %s306 = smul.u32 16, %s30
        %s307 = smul.u32 16, %s30
        %s308 = smul.u32 4, %s28
        %p309 = scmp.eq.s32.totalorder %s30, 0
        // Predicated region
        $region45: #{tpu_custom_call.1} parent=31 // pred_check
          %p310 = pneg %p309
        $region46: #{tpu_custom_call.1} parent=31 // pred_check_branch
          %312 = sbr.rel (%p310) target = $region48
        $region47: #{tpu_custom_call.1} parent=31 // pred_region
          %313 = vst [vmem:[#allocation2] sm:$0xff] 0.0
          %314 = vst [vmem:[#allocation2 + $0x8] sm:$0xff] 0.0
          %315 = vst [vmem:[#allocation2 + $0x10] sm:$0xff] 0.0
          %316 = vst [vmem:[#allocation2 + $0x18] sm:$0xff] 0.0
          %317 = vst [vmem:[#allocation3] sm:$0xff] 0.0
          %318 = vst [vmem:[#allocation3 + $0x8] sm:$0xff] 0.0
          %319 = vst [vmem:[#allocation3 + $0x10] sm:$0xff] 0.0
          %320 = vst [vmem:[#allocation3 + $0x18] sm:$0xff] 0.0
        $region48: #{tpu_custom_call.1} parent=31 // pred_fallthru
          _
        %v321 = vld [vmem:[%s251] sm:$0xf]
        %v322 = vld [vmem:[%s251 + $0x4] sm:$0xf]
        %v323 = vld [vmem:[%s251 + $0x8] sm:$0xf]
        %v324 = vld [vmem:[%s251 + $0xc] sm:$0xf]
        %v325 = vld [vmem:[#allocation2] sm:$0xff]
        %v326 = vld [vmem:[#allocation2 + $0x8] sm:$0xff]
        %v327 = vld [vmem:[#allocation2 + $0x10] sm:$0xff]
        %v328 = vld [vmem:[#allocation2 + $0x18] sm:$0xff]
        %v329 = vld [vmem:[%s261] sm:$0xf]
        %v330 = vld [vmem:[%s261 + $0x4] sm:$0xf]
        %v331 = vld [vmem:[%s261 + $0x8] sm:$0xf]
        %v332 = vld [vmem:[%s261 + $0xc] sm:$0xf]
        %v333 = vld [vmem:[%s261 + $0x10] sm:$0xf]
        %v334 = vld [vmem:[%s261 + $0x14] sm:$0xf]
        %v335 = vld [vmem:[%s261 + $0x18] sm:$0xf]
        %v336 = vld [vmem:[%s261 + $0x1c] sm:$0xf]
        %v337 = vld [vmem:[%s261 + $0x20] sm:$0xf]
        %v338 = vld [vmem:[%s261 + $0x24] sm:$0xf]
        %v339 = vld [vmem:[%s261 + $0x28] sm:$0xf]
        %v340 = vld [vmem:[%s261 + $0x2c] sm:$0xf]
        %v341 = vld [vmem:[%s261 + $0x30] sm:$0xf]
        %v342 = vld [vmem:[%s261 + $0x34] sm:$0xf]
        %v343 = vld [vmem:[%s261 + $0x38] sm:$0xf]
        %v344 = vld [vmem:[%s261 + $0x3c] sm:$0xf]
        %v349 = vunpack.c.l.b16 %v321
        %v350 = vunpack.c.l.b16 %v322
        %v351 = vunpack.c.l.b16 %v323
        %v352 = vunpack.c.l.b16 %v324
        %v353 = vpack.c.b16 %v350, %v349
        %v354 = vpack.c.b16 %v352, %v351
        %v373 = vunpack.c.l.b16 %v329
        %v374 = vunpack.c.l.b16 %v330
        %v375 = vunpack.c.l.b16 %v331
        %v376 = vunpack.c.l.b16 %v332
        %v377 = vunpack.c.l.b16 %v333
        %v378 = vunpack.c.l.b16 %v334
        %v379 = vunpack.c.l.b16 %v335
        %v380 = vunpack.c.l.b16 %v336
        %v381 = vunpack.c.l.b16 %v337
        %v382 = vunpack.c.l.b16 %v338
        %v383 = vunpack.c.l.b16 %v339
        %v384 = vunpack.c.l.b16 %v340
        %v385 = vunpack.c.l.b16 %v341
        %v386 = vunpack.c.l.b16 %v342
        %v387 = vunpack.c.l.b16 %v343
        %v388 = vunpack.c.l.b16 %v344
        %v389 = vpack.c.b16 %v374, %v373
        %v390 = vpack.c.b16 %v376, %v375
        %v391 = vpack.c.b16 %v378, %v377
        %v392 = vpack.c.b16 %v380, %v379
        %v393 = vpack.c.b16 %v382, %v381
        %v394 = vpack.c.b16 %v384, %v383
        %v395 = vpack.c.b16 %v386, %v385
        %v396 = vpack.c.b16 %v388, %v387
        %405 = vmatpush.bf16.msra.mxu0 %v396
        %406 = vmatpush.bf16.msra.mxu0 %v395
        %407 = vmatpush.bf16.msra.mxu0 %v394
        %408 = vmatpush.bf16.msra.mxu0 %v393
        %409 = vmatpush.bf16.msra.mxu0 %v392
        %410 = vmatpush.bf16.msra.mxu0 %v391
        %411 = vmatpush.bf16.msra.mxu0 %v390
        %412 = vmatpush.bf16.msra.mxu0 %v389
        %413 = vmatmul.bf16.gmra.mxu0 %v353
        %v414 = vpop.f32.mrf.mxu0
        %v415 = vadd.f32 0.0, %v414
        %v416 = vpop.f32.mrf.mxu0
        %v417 = vadd.f32 0.0, %v416
        %418 = vmatmul.bf16.gmra.mxu0 %v354
        %v419 = vpop.f32.mrf.mxu0
        %v420 = vadd.f32 0.0, %v419
        %v421 = vpop.f32.mrf.mxu0
        %v422 = vadd.f32 0.0, %v421
        %423 = vdwg.mxu0
        %v424 = vadd.f32 %v325, %v415
        %v425 = vadd.f32 %v326, %v417
        %v426 = vadd.f32 %v327, %v420
        %v427 = vadd.f32 %v328, %v422
        %428 = vst [vmem:[#allocation2] sm:$0xff] %v424
        %429 = vst [vmem:[#allocation2 + $0x8] sm:$0xff] %v425
        %430 = vst [vmem:[#allocation2 + $0x10] sm:$0xff] %v426
        %431 = vst [vmem:[#allocation2 + $0x18] sm:$0xff] %v427
        %v432 = vld [vmem:[#allocation3] sm:$0xff]
        %v433 = vld [vmem:[#allocation3 + $0x8] sm:$0xff]
        %v434 = vld [vmem:[#allocation3 + $0x10] sm:$0xff]
        %v435 = vld [vmem:[#allocation3 + $0x18] sm:$0xff]
        %v436 = vld [vmem:[%s271] sm:$0xf]
        %v437 = vld [vmem:[%s271 + $0x4] sm:$0xf]
        %v438 = vld [vmem:[%s271 + $0x8] sm:$0xf]
        %v439 = vld [vmem:[%s271 + $0xc] sm:$0xf]
        %v440 = vld [vmem:[%s271 + $0x10] sm:$0xf]
        %v441 = vld [vmem:[%s271 + $0x14] sm:$0xf]
        %v442 = vld [vmem:[%s271 + $0x18] sm:$0xf]
        %v443 = vld [vmem:[%s271 + $0x1c] sm:$0xf]
        %v444 = vld [vmem:[%s271 + $0x20] sm:$0xf]
        %v445 = vld [vmem:[%s271 + $0x24] sm:$0xf]
        %v446 = vld [vmem:[%s271 + $0x28] sm:$0xf]
        %v447 = vld [vmem:[%s271 + $0x2c] sm:$0xf]
        %v448 = vld [vmem:[%s271 + $0x30] sm:$0xf]
        %v449 = vld [vmem:[%s271 + $0x34] sm:$0xf]
        %v450 = vld [vmem:[%s271 + $0x38] sm:$0xf]
        %v451 = vld [vmem:[%s271 + $0x3c] sm:$0xf]
        %v468 = vunpack.c.l.b16 %v436
        %v469 = vunpack.c.l.b16 %v437
        %v470 = vunpack.c.l.b16 %v438
        %v471 = vunpack.c.l.b16 %v439
        %v472 = vunpack.c.l.b16 %v440
        %v473 = vunpack.c.l.b16 %v441
        %v474 = vunpack.c.l.b16 %v442
        %v475 = vunpack.c.l.b16 %v443
        %v476 = vunpack.c.l.b16 %v444
        %v477 = vunpack.c.l.b16 %v445
        %v478 = vunpack.c.l.b16 %v446
        %v479 = vunpack.c.l.b16 %v447
        %v480 = vunpack.c.l.b16 %v448
        %v481 = vunpack.c.l.b16 %v449
        %v482 = vunpack.c.l.b16 %v450
        %v483 = vunpack.c.l.b16 %v451
        %v484 = vpack.c.b16 %v469, %v468
        %v485 = vpack.c.b16 %v471, %v470
        %v486 = vpack.c.b16 %v473, %v472
        %v487 = vpack.c.b16 %v475, %v474
        %v488 = vpack.c.b16 %v477, %v476
        %v489 = vpack.c.b16 %v479, %v478
        %v490 = vpack.c.b16 %v481, %v480
        %v491 = vpack.c.b16 %v483, %v482
        %500 = vmatpush.bf16.msra.mxu0 %v491
        %501 = vmatpush.bf16.msra.mxu0 %v490
        %502 = vmatpush.bf16.msra.mxu0 %v489
        %503 = vmatpush.bf16.msra.mxu0 %v488
        %504 = vmatpush.bf16.msra.mxu0 %v487
        %505 = vmatpush.bf16.msra.mxu0 %v486
        %506 = vmatpush.bf16.msra.mxu0 %v485
        %507 = vmatpush.bf16.msra.mxu0 %v484
        %508 = vmatmul.bf16.gmra.mxu0 %v353
        %v509 = vpop.f32.mrf.mxu0
        %v510 = vadd.f32 0.0, %v509
        %v511 = vpop.f32.mrf.mxu0
        %v512 = vadd.f32 0.0, %v511
        %513 = vmatmul.bf16.gmra.mxu0 %v354
        %v514 = vpop.f32.mrf.mxu0
        %v515 = vadd.f32 0.0, %v514
        %v516 = vpop.f32.mrf.mxu0
        %v517 = vadd.f32 0.0, %v516
        %518 = vdwg.mxu0
        %v519 = vadd.f32 %v432, %v510
        %v520 = vadd.f32 %v433, %v512
        %v521 = vadd.f32 %v434, %v515
        %v522 = vadd.f32 %v435, %v517
        %523 = vst [vmem:[#allocation3] sm:$0xff] %v519
        %524 = vst [vmem:[#allocation3 + $0x8] sm:$0xff] %v520
        %525 = vst [vmem:[#allocation3 + $0x10] sm:$0xff] %v521
        %526 = vst [vmem:[#allocation3 + $0x18] sm:$0xff] %v522
        %p527 = scmp.eq.s32.totalorder %s30, 1
        // Predicated region
        $region49: #{tpu_custom_call.1} parent=31 // pred_check
          %p528 = pneg %p527
        $region50: #{tpu_custom_call.1} parent=31 // pred_check_branch
          %530 = sbr.rel (%p528) target = $region52
        $region51: #{tpu_custom_call.1} parent=31 // pred_region
          %v531 = vld [vmem:[#allocation2] sm:$0xff]
          %v532 = vld [vmem:[#allocation2 + $0x8] sm:$0xff]
          %v533 = vld [vmem:[#allocation2 + $0x10] sm:$0xff]
          %v534 = vld [vmem:[#allocation2 + $0x18] sm:$0xff]
          %v535 = vxor.u32 %v531, 2147483648
          %v536 = vxor.u32 %v532, 2147483648
          %v537 = vxor.u32 %v533, 2147483648
          %v538 = vxor.u32 %v534, 2147483648
          %v539 = vmul.f32 %v535, 1.442695
          %v540 = vpow.pop %v539
          %v541 = vmul.f32 %v536, 1.442695
          %v542 = vpow.pop %v541
          %v543 = vmul.f32 %v537, 1.442695
          %v544 = vpow.pop %v543
          %v545 = vmul.f32 %v538, 1.442695
          %v546 = vpow.pop %v545
          %v547 = vadd.f32 %v540, 1.0
          %v548 = vadd.f32 %v542, 1.0
          %v549 = vadd.f32 %v544, 1.0
          %v550 = vadd.f32 %v546, 1.0
          %v551 = vrcp.pop %v547
          %v552 = vmul.f32 %v547, %v551
          %v553 = vsub.f32 1.0, %v552
          %v554 = vmul.f32 %v551, %v553
          %v555 = vadd.f32 %v551, %v554
          %vm556 = vweird.f32 %v547
          %vm557 = vweird.f32 %v551
          %vm558 = vmor %vm556, %vm557
          %v559 = vsel %vm558, %v551, %v555
          %v560 = vand.u32 2147483647, %v547
          %vm561 = vcmp.eq.f32.partialorder %v560, 8.507059e+37
          %v562 = vand.u32 %v547, 2147483648
          %v563 = vor.u32 1.1754944e-38, %v562
          %v564 = vsel %vm561, %v563, %v559
          %v565 = vmul.f32 1.0, %v564
          %v566 = vrcp.pop %v548
          %v567 = vmul.f32 %v548, %v566
          %v568 = vsub.f32 1.0, %v567
          %v569 = vmul.f32 %v566, %v568
          %v570 = vadd.f32 %v566, %v569
          %vm571 = vweird.f32 %v548
          %vm572 = vweird.f32 %v566
          %vm573 = vmor %vm571, %vm572
          %v574 = vsel %vm573, %v566, %v570
          %v575 = vand.u32 2147483647, %v548
          %vm576 = vcmp.eq.f32.partialorder %v575, 8.507059e+37
          %v577 = vand.u32 %v548, 2147483648
          %v578 = vor.u32 1.1754944e-38, %v577
          %v579 = vsel %vm576, %v578, %v574
          %v580 = vmul.f32 1.0, %v579
          %v581 = vrcp.pop %v549
          %v582 = vmul.f32 %v549, %v581
          %v583 = vsub.f32 1.0, %v582
          %v584 = vmul.f32 %v581, %v583
          %v585 = vadd.f32 %v581, %v584
          %vm586 = vweird.f32 %v549
          %vm587 = vweird.f32 %v581
          %vm588 = vmor %vm586, %vm587
          %v589 = vsel %vm588, %v581, %v585
          %v590 = vand.u32 2147483647, %v549
          %vm591 = vcmp.eq.f32.partialorder %v590, 8.507059e+37
          %v592 = vand.u32 %v549, 2147483648
          %v593 = vor.u32 1.1754944e-38, %v592
          %v594 = vsel %vm591, %v593, %v589
          %v595 = vmul.f32 1.0, %v594
          %v596 = vrcp.pop %v550
          %v597 = vmul.f32 %v550, %v596
          %v598 = vsub.f32 1.0, %v597
          %v599 = vmul.f32 %v596, %v598
          %v600 = vadd.f32 %v596, %v599
          %vm601 = vweird.f32 %v550
          %vm602 = vweird.f32 %v596
          %vm603 = vmor %vm601, %vm602
          %v604 = vsel %vm603, %v596, %v600
          %v605 = vand.u32 2147483647, %v550
          %vm606 = vcmp.eq.f32.partialorder %v605, 8.507059e+37
          %v607 = vand.u32 %v550, 2147483648
          %v608 = vor.u32 1.1754944e-38, %v607
          %v609 = vsel %vm606, %v608, %v604
          %v610 = vmul.f32 1.0, %v609
          %v611 = vmul.f32 %v531, %v565
          %v612 = vmul.f32 %v532, %v580
          %v613 = vmul.f32 %v533, %v595
          %v614 = vmul.f32 %v534, %v610
          %v615 = vld [vmem:[#allocation3] sm:$0xff]
          %v616 = vld [vmem:[#allocation3 + $0x8] sm:$0xff]
          %v617 = vld [vmem:[#allocation3 + $0x10] sm:$0xff]
          %v618 = vld [vmem:[#allocation3 + $0x18] sm:$0xff]
          %v619 = vmul.f32 %v611, %v615
          %v620 = vmul.f32 %v612, %v616
          %v621 = vmul.f32 %v613, %v617
          %v622 = vmul.f32 %v614, %v618
          %v623 = vpack.c.bf16 %v619, %v619
          %v624 = vpack.c.bf16 %v620, %v620
          %v625 = vpack.c.bf16 %v621, %v621
          %v626 = vpack.c.bf16 %v622, %v622
          %627 = vst [vmem:[%s304] sm:$0xf] %v623
          %628 = vst [vmem:[%s304 + $0x4] sm:$0xf] %v624
          %629 = vst [vmem:[%s304 + $0x8] sm:$0xf] %v625
          %630 = vst [vmem:[%s304 + $0xc] sm:$0xf] %v626
        $region52: #{tpu_custom_call.1} parent=31 // pred_fallthru
          _
        %s631 = sand.u32 %s136, 1
        %s632 = scalar_lea.sflag [#allocation6], %s631
        %s633 = sand.u32 %s136, 1
        %s634 = smul.addr %s633, 16
        %s635 = scalar_lea.vmem [#allocation10], %s634
        // Predicated region
        $region53: #{tpu_custom_call.1} parent=31 // pred_check
          %p636 = pneg %p146
        $region54: #{tpu_custom_call.1} parent=31 // pred_check_branch
          %638 = sbr.rel (%p636) target = $region56
        $region55: #{tpu_custom_call.1} parent=31 // pred_region
          %s639 = smul.u32 4, %s28
          %641 = vsyncadd %s632, 0
          %s642 = smul.addr %s639, 3
          %s643 = sadd.s32 %s29, %s642
          %s644 = smul.addr %s643, 4
          %s645 = scalar_lea.hbm %s3, %s644
          %s646 = sshll.u32 %s635, 4
          %s647 = int_to_ptr.vmem [resolvable:$true] %s646
          %s648 = sshll.u32 %s645, 4
          %s649 = int_to_ptr.hbm [resolvable:$true] %s648
          %654 = dma.vmem_to_hbm [thread:$0]  %s647, 256, %s649, %s632, 64, 192, 4
        $region56: #{tpu_custom_call.1} parent=31 // pred_fallthru
          _
      $region32: #{tpu_custom_call.1} parent=5 // pred_fallthru
        _
      %p655 = scmp.le.s32.totalorder 2, %s18
      // Predicated region
      $region57: #{tpu_custom_call.1} parent=5 // pred_check
        %p656 = pneg %p655
      $region58: #{tpu_custom_call.1} parent=5 // pred_check_branch
        %658 = sbr.rel (%p656) target = $region60
      $region59: #{tpu_custom_call.1} parent=5 // pred_region
        %s659 = ssub.s32 %s18, 2
        // Predicated region
        $region61: #{tpu_custom_call.1} parent=59 // pred_check
          %p660 = pneg %p152
        $region62: #{tpu_custom_call.1} parent=59 // pred_check_branch
          %662 = sbr.rel (%p660) target = $region64
        $region63: #{tpu_custom_call.1} parent=59 // pred_region
          %s663 = sand.u32 %s137, 1
          %s664 = scalar_lea.sflag [#allocation6], %s663
          %s665 = sand.u32 %s137, 1
          %s666 = smul.addr %s665, 16
          %s667 = scalar_lea.vmem [#allocation10], %s666
          %669 = dma.done %s664, 256
        $region64: #{tpu_custom_call.1} parent=59 // pred_fallthru
          _
      $region60: #{tpu_custom_call.1} parent=5 // pred_fallthru
        _
    $region6: #{tpu_custom_call.1} parent=1 // loop_footer
      %s22 = sadd.s32 1, %s18
    $region7: #{tpu_custom_call.1} parent=1 // loop_footer_branch
      %17 = sbr.rel target = $region3
    $region8: #{tpu_custom_call.1} parent=1 // loop_exit
      _
    %670 = vsyncpa [#allocation5], 1
    %s671 = scalar_lea.sflag [#allocation5], 1
    %672 = vsyncpa %s671, 1
    %673 = vsyncpa [#allocation8], 1
    %s674 = scalar_lea.sflag [#allocation8], 1
    %675 = vsyncpa %s674, 1
    %676 = vsyncpa [#allocation6], 1
    %s677 = scalar_lea.sflag [#allocation6], 1
    %678 = vsyncpa %s677, 1

</llo_original>
